<compile_context>
chip_gen: v7x
topology: tpu7x:2x2x1
jax: 0.10.0
libtpu: 0.0.40
codegen_flags: <defaults>
</compile_context>

<pallas_src>
import jax
import jax.numpy as jnp
from jax.experimental import pallas as pl
from jax.experimental.pallas import tpu as pltpu


def _round_up(a: int, m: int) -> int:
    return ((a + m - 1) // m) * m


def _vmem_budget_bytes() -> int:
    """Physical VMEM minus headroom (v5e/v6e: 128 MiB, v7x: 64 MiB)."""
    try:
        cap = int(pltpu.get_tpu_info().vmem_capacity_bytes)
    except Exception:
        cap = 64 << 20  # conservative (v7x-sized) fallback
    return max(16 << 20, cap - (16 << 20))


def _gating_kernel(x_ref, w_ref, b_ref, o_ref):
    # x_ref: (TB, D)   w_ref: (D, E_out)   b_ref: (1, E_out)   o_ref: (TB, E_out)
    # Canonical (M,K)x(K,N) MXU matmul with f32 accumulation; f32 bias add.
    acc = jnp.dot(x_ref[...], w_ref[...], preferred_element_type=jnp.float32)
    o_ref[...] = (acc + b_ref[...]).astype(o_ref.dtype)
    # NOTE: if the caller immediately takes softmax/top-k of these logits,
    # fuse it here as an epilogue (jnp.exp -> EUP slot, pl.reciprocal(approx=True))
    # to avoid a second B x E HBM round trip.  The reference module returns raw
    # logits, so semantics are kept unchanged.


def prepare_gating_params(weight, bias, *, weight_dtype=None, e_pad_min_d=512):
    """One-time parameter preprocessing (hoist out of the per-step hot path).

    weight: (E, D) PyTorch nn.Linear layout, bias: (E,).
    Returns a dict with the transposed / (conditionally) padded weight,
    a 2-D f32 bias, and the true expert count.
    """
    E, D = weight.shape
    assert bias.shape == (E,)
    # Pad the expert axis to a lane-dense multiple of 128 only when D is large
    # enough that the extra output-store traffic is negligible.
    E_out = _round_up(E, 128) if D >= e_pad_min_d else E

    w = weight.astype(weight_dtype) if weight_dtype is not None else weight
    w_t = jnp.transpose(w)                                # (D, E)
    if E_out != E:
        w_t = jnp.pad(w_t, ((0, 0), (0, E_out - E)))       # (D, E_out)
    b = bias.astype(jnp.float32)
    if E_out != E:
        b = jnp.pad(b, (0, E_out - E))
    return {"w_t": w_t, "b2": b.reshape(1, E_out), "num_experts": E}


def gating_forward(x, params, *, block_b=512, out_dtype=None):
    """GatingNetwork forward: logits = x @ W.T + b, shape (B, num_experts)."""
    w_t, b2, E = params["w_t"], params["b2"], params["num_experts"]
    B, D = x.shape
    Dw, E_out = w_t.shape
    assert D == Dw
    # nn.Linear semantics: output dtype follows input dtype (override with
    # out_dtype=jnp.float32 if downstream softmax/top-k wants f32 logits).
    out_dtype = x.dtype if out_dtype is None else out_dtype

    x_isz = jnp.dtype(x.dtype).itemsize
    w_isz = jnp.dtype(w_t.dtype).itemsize
    o_isz = jnp.dtype(out_dtype).itemsize

    # --- batch tile selection (no padding of x; tail block is masked) --------
    sub = 8
    budget = _vmem_budget_bytes()
    TB = max(sub, _round_up(min(block_b, B), sub))
    # Give megacore (v7x) at least two grid steps when the batch allows it.
    if pl.cdiv(B, TB) < 2 and B > sub:
        TB = max(sub, _round_up(pl.cdiv(B, 2), sub))

    def footprint(tb):
        return (2 * tb * D * x_isz            # x, double buffered
                + 2 * D * E_out * w_isz       # weight (resident; 2 bufs allocated)
                + 2 * E_out * 4               # bias
                + 2 * tb * E_out * o_isz)     # output, double buffered

    while TB > sub and footprint(TB) > budget:
        TB = max(sub, _round_up(TB // 2, sub))
    # TODO(synk): if D*E_out alone ever exceeds the VMEM budget (huge D on v7x),
    # add an innermost "arbitrary" K grid axis + f32 VMEM accumulator scratch
    # instead of shrinking TB further.

    grid = (pl.cdiv(B, TB),)

    vmem_limit = int(min(budget, max(4 << 20, int(footprint(TB) * 1.25))))

    cost = pl.CostEstimate(
        flops=2 * B * D * E_out,
        transcendentals=0,
        bytes_accessed=(B * D * x_isz + D * E_out * w_isz
                        + E_out * 4 + B * E_out * o_isz),
    )

    out = pl.pallas_call(
        _gating_kernel,
        out_shape=jax.ShapeDtypeStruct((B, E_out), out_dtype),
        grid_spec=pltpu.PrefetchScalarGridSpec(
            num_scalar_prefetch=0,
            grid=grid,
            in_specs=[
                pl.BlockSpec((TB, D), lambda i: (i, 0)),      # x: streamed per tile
                pl.BlockSpec((D, E_out), lambda i: (0, 0)),   # weight: VMEM resident
                pl.BlockSpec((1, E_out), lambda i: (0, 0)),   # bias:   VMEM resident
            ],
            out_specs=pl.BlockSpec((TB, E_out), lambda i: (i, 0)),
        ),
        compiler_params=pltpu.CompilerParams(
            dimension_semantics=("parallel",),   # batch tiles across TCs on v7x
            vmem_limit_bytes=vmem_limit,
        ),
        cost_estimate=cost,
    )(x, w_t, b2)

    # Slice off the (optional) expert padding outside the kernel.
    return out if E_out == E else out[:, :E]


if __name__ == "__main__":
    key = jax.random.PRNGKey(0)
    kx, kw, kb = jax.random.split(key, 3)

    batch, input_dim, num_experts = 8, 32, 4

    x = jax.random.normal(kx, (batch, input_dim), dtype=jnp.float32)
    # Deterministic parameter init (mimics nn.Linear uniform(-1/sqrt(D), 1/sqrt(D)))
    bound = 1.0 / jnp.sqrt(jnp.float32(input_dim))
    weight = jax.random.uniform(kw, (num_experts, input_dim),
                                minval=-bound, maxval=bound, dtype=jnp.float32)
    bias = jax.random.uniform(kb, (num_experts,),
                              minval=-bound, maxval=bound, dtype=jnp.float32)

    # One-time parameter prep (hoisted out of the hot path), then forward.
    params = prepare_gating_params(weight, bias)
    out = jax.block_until_ready(gating_forward(x, params))

    # Reference check against plain JAX (same math as torch's F.linear).
    ref = x @ weight.T + bias
    assert out.shape == (batch, num_experts)
    assert jnp.allclose(out, ref, atol=1e-5, rtol=1e-5)

    # Optional bf16 *weight* streaming (x stays in its native dtype; f32 MXU
    # accumulation) -- looser tolerance.
    params_bf16 = prepare_gating_params(weight, bias, weight_dtype=jnp.bfloat16)
    out_bf16 = jax.block_until_ready(gating_forward(x, params_bf16))
    assert jnp.allclose(out_bf16, ref, atol=5e-2, rtol=5e-2)

    print("KERNEL_OK")
</pallas_src>

<mosaic_0001>
module attributes {stable_mosaic.version = 11 : i64} {
  func.func @_gating_kernel(%arg0: i32, %arg1: memref<8x32xf32, #tpu.memory_space<vmem>>, %arg2: memref<32x4xf32, #tpu.memory_space<vmem>>, %arg3: memref<1x4xf32, #tpu.memory_space<vmem>>, %arg4: memref<8x4xf32, #tpu.memory_space<vmem>>) attributes {dimension_semantics = [#tpu.dimension_semantics<parallel>], iteration_bounds = array<i64: 1>, scalar_prefetch = 0 : i64, scratch_operands = 0 : i64, tpu.core_type = #tpu.core_type<tc>, window_params = [{transform_indices = @transform_0, window_bounds = array<i64: 8, 32>}, {pipeline_mode = #tpu.pipeline_mode<synchronous>, transform_indices = @transform_1, window_bounds = array<i64: 32, 4>}, {pipeline_mode = #tpu.pipeline_mode<synchronous>, transform_indices = @transform_2, window_bounds = array<i64: 1, 4>}, {transform_indices = @transform_3, window_bounds = array<i64: 8, 4>}]} {
    %c0 = arith.constant 0 : index
    %c0_0 = arith.constant 0 : index
    %0 = vector.load %arg1[%c0, %c0_0] : memref<8x32xf32, #tpu.memory_space<vmem>>, vector<8x32xf32>
    %c0_1 = arith.constant 0 : index
    %c0_2 = arith.constant 0 : index
    %1 = vector.load %arg2[%c0_1, %c0_2] : memref<32x4xf32, #tpu.memory_space<vmem>>, vector<32x4xf32>
    %cst = arith.constant dense<0.000000e+00> : vector<8x4xf32>
    %2 = tpu.matmul %0, %1, %cst {dimension_numbers = #tpu.dot_dimension_numbers<[1], [0], [0], [1], [0, 0, 1, 1], [], []>} : vector<8x32xf32>, vector<32x4xf32>, vector<8x4xf32> -> vector<8x4xf32>
    %c0_3 = arith.constant 0 : index
    %c0_4 = arith.constant 0 : index
    %3 = vector.load %arg3[%c0_3, %c0_4] : memref<1x4xf32, #tpu.memory_space<vmem>>, vector<1x4xf32>
    %4 = vector.broadcast %3 : vector<1x4xf32> to vector<8x4xf32>
    %5 = arith.addf %2, %4 : vector<8x4xf32>
    %c0_5 = arith.constant 0 : index
    %c0_6 = arith.constant 0 : index
    %6 = vector.load %arg4[%c0_5, %c0_6] : memref<8x4xf32, #tpu.memory_space<vmem>>, vector<8x4xf32>
    tpu.vector_store %arg4[%c0_5, %c0_6], %5 {strides = array<i32>} : memref<8x4xf32, #tpu.memory_space<vmem>>, vector<8x4xf32>,
    return
  }
  func.func @transform_0(%arg0: i32) -> (i32, i32) {
    %c0_i32 = arith.constant 0 : i32
    %c0_i32_0 = arith.constant 0 : i32
    return %arg0, %c0_i32 : i32, i32
  }
  func.func @transform_1(%arg0: i32) -> (i32, i32) {
    %c0_i32 = arith.constant 0 : i32
    %c0_i32_0 = arith.constant 0 : i32
    %c0_i32_1 = arith.constant 0 : i32
    return %c0_i32, %c0_i32_0 : i32, i32
  }
  func.func @transform_2(%arg0: i32) -> (i32, i32) {
    %c0_i32 = arith.constant 0 : i32
    %c0_i32_0 = arith.constant 0 : i32
    %c0_i32_1 = arith.constant 0 : i32
    return %c0_i32, %c0_i32_0 : i32, i32
  }
  func.func @transform_3(%arg0: i32) -> (i32, i32) {
    %c0_i32 = arith.constant 0 : i32
    %c0_i32_0 = arith.constant 0 : i32
    return %arg0, %c0_i32 : i32, i32
  }
}

</mosaic_0001>

<llo_original>
// kernel: tpu_custom_call.1
$region0: #{tpu_custom_call.1}
  #allocation0 [shape = 'u32[]', space=smem, size = 0x4, offset = 0x4, fixed_abs, tag = 'smem constant byte address 0x4 - core index']
  #allocation1 [shape = 'u32[144,128]{1,0:T(1,128)}', space=vmem, size = 0x12000, scoped, tag = 'internal scratch']
  %s0 = inlined_call_operand.vmem [shape: f32[8,32], index: 0, kind: input, shape index: {}]
  %s1 = inlined_call_operand.vmem [shape: f32[32,4], index: 1, kind: input, shape index: {}]
  %s2 = inlined_call_operand.vmem [shape: f32[1,4], index: 2, kind: input, shape index: {}]
  %s3 = inlined_call_operand.vmem [shape: f32[8,4], index: 3, kind: output, shape index: {}]
  %s4 = sld [smem:[#allocation0]]
  $region22: #{tpu_custom_call.1} parent=0
    _
  %s6 = ssub.s32 1, %s4
  %s7 = scalar_select 0, %s6, %s4
  // Predicated region
  $region2: #{tpu_custom_call.1} parent=0 // pred_check
    _
  $region3: #{tpu_custom_call.1} parent=0 // pred_check_branch
    %9 = sbr.rel (0) target = $region5
  $region4: #{tpu_custom_call.1} parent=0 // pred_region
    _
  $region5: #{tpu_custom_call.1} parent=0 // pred_fallthru
    _
  // Predicated region
  $region6: #{tpu_custom_call.1} parent=0 // pred_check
    _
  $region7: #{tpu_custom_call.1} parent=0 // pred_check_branch
    %11 = sbr.rel (0) target = $region9
  $region8: #{tpu_custom_call.1} parent=0 // pred_region
    _
  $region9: #{tpu_custom_call.1} parent=0 // pred_fallthru
    _
  // Predicated region
  $region10: #{tpu_custom_call.1} parent=0 // pred_check
    _
  $region11: #{tpu_custom_call.1} parent=0 // pred_check_branch
    %13 = sbr.rel (0) target = $region13
  $region12: #{tpu_custom_call.1} parent=0 // pred_region
    _
  $region13: #{tpu_custom_call.1} parent=0 // pred_fallthru
    _
  %v14 = vld [vmem:[%s0] sm:$0xff]
  %v15 = vld [vmem:[%s1] sm:$0xff]
  %v16 = vld [vmem:[%s1 + $0x8] sm:$0xff]
  %v17 = vld [vmem:[%s1 + $0x10] sm:$0xff]
  %v18 = vld [vmem:[%s1 + $0x18] sm:$0xff]
  %v19 = vld [vmem:[%s2] sm:$0x1]
  %v21 = vlaneseq
  %v22 = vshrl.u32 %v21, 7
  %v23 = vsub.s32 0, %v22
  %v24 = vrot.slane %v19, %v23
  %vm26 = vcmask 261120
  %v28 = vsel %vm26, %v14, 0
  %30 = vmatprep.subr.mxu0 0.0
  %31 = vmatpush1.msra.mxu0 %v15
  %32 = vmatprep.subr.mxu0 0.0
  %33 = vmatpush1.msra.mxu0 %v16
  %34 = vmatprep.subr.mxu0 0.0
  %35 = vmatpush1.msra.mxu0 %v17
  %36 = vmatprep.subr.mxu0 0.0
  %37 = vmatpush1.msra.mxu0 %v18
  %38 = vmatprep.subr.mxu0 0.0
  %39 = vmatpush1.msra.mxu0 0.0
  %40 = vmatprep.subr.mxu0 0.0
  %41 = vmatpush1.msra.mxu0 0.0
  %42 = vmatprep.subr.mxu0 0.0
  %43 = vmatpush1.msra.mxu0 0.0
  %44 = vmatprep.subr.mxu0 0.0
  %45 = vmatpush1.msra.mxu0 0.0
  %46 = vmatprep.subr.mxu0 0.0
  %47 = vmatpush1.msra.mxu0 0.0
  %48 = vmatprep.subr.mxu0 0.0
  %49 = vmatpush1.msra.mxu0 0.0
  %50 = vmatprep.subr.mxu0 0.0
  %51 = vmatpush1.msra.mxu0 0.0
  %52 = vmatprep.subr.mxu0 0.0
  %53 = vmatpush1.msra.mxu0 0.0
  %54 = vmatprep.subr.mxu0 0.0
  %55 = vmatpush1.msra.mxu0 0.0
  %56 = vmatprep.subr.mxu0 0.0
  %57 = vmatpush1.msra.mxu0 0.0
  %58 = vmatprep.subr.mxu0 0.0
  %59 = vmatpush1.msra.mxu0 0.0
  %60 = vmatprep.subr.mxu0 0.0
  %61 = vmatpush1.msra.mxu0 0.0
  %62 = vmatprep.subr.mxu0 0.0
  %63 = vmatpush1.msra.mxu0 0.0
  %64 = vmatprep.subr.mxu0 0.0
  %65 = vmatpush1.msra.mxu0 0.0
  %66 = vmatprep.subr.mxu0 0.0
  %67 = vmatpush1.msra.mxu0 0.0
  %68 = vmatprep.subr.mxu0 0.0
  %69 = vmatpush1.msra.mxu0 0.0
  %70 = vmatprep.subr.mxu0 0.0
  %71 = vmatpush1.msra.mxu0 0.0
  %72 = vmatprep.subr.mxu0 0.0
  %73 = vmatpush1.msra.mxu0 0.0
  %74 = vmatprep.subr.mxu0 0.0
  %75 = vmatpush1.msra.mxu0 0.0
  %76 = vmatprep.subr.mxu0 0.0
  %77 = vmatpush1.msra.mxu0 0.0
  %78 = vmatprep.subr.mxu0 0.0
  %79 = vmatpush1.msra.mxu0 0.0
  %80 = vmatprep.subr.mxu0 0.0
  %81 = vmatpush1.msra.mxu0 0.0
  %82 = vmatprep.subr.mxu0 0.0
  %83 = vmatpush1.msra.mxu0 0.0
  %84 = vmatprep.subr.mxu0 0.0
  %85 = vmatpush1.msra.mxu0 0.0
  %86 = vmatprep.subr.mxu0 0.0
  %87 = vmatpush1.msra.mxu0 0.0
  %88 = vmatprep.subr.mxu0 0.0
  %89 = vmatpush1.msra.mxu0 0.0
  %90 = vmatprep.subr.mxu0 0.0
  %91 = vmatpush1.msra.mxu0 0.0
  %92 = vmatprep.subr.mxu0 0.0
  %93 = vmatpush1.msra.mxu0 0.0
  %94 = vmatprep.mubr.f32.mxu0 0.0
  %95 = vmatmul.mubr.f32.gmra.mrb[0].mxu0 %v28
  %v96 = vpop.f32.mrb[0].mxu0
  %v97 = vadd.f32 %v24, %v96
  %v98 = vpop.f32.mrb[0].mxu0
  %99 = vdwg.mxu0
  %vm100 = vcmask 31744
  %101 = vst.msk [vmem:[%s3] sm:$0xff] %vm100, %v97
  // Predicated region
  $region14: #{tpu_custom_call.1} parent=0 // pred_check
    _
  $region15: #{tpu_custom_call.1} parent=0 // pred_check_branch
    %103 = sbr.rel (0) target = $region17
  $region16: #{tpu_custom_call.1} parent=0 // pred_region
    _
  $region17: #{tpu_custom_call.1} parent=0 // pred_fallthru
    _
  // Predicated region
  $region18: #{tpu_custom_call.1} parent=0 // pred_check
    _
  $region19: #{tpu_custom_call.1} parent=0 // pred_check_branch
    %105 = sbr.rel (0) target = $region21
  $region20: #{tpu_custom_call.1} parent=0 // pred_region
    _
  $region21: #{tpu_custom_call.1} parent=0 // pred_fallthru
    _

</llo_original>
